<compile_context>
chip_gen: v5e
topology: v5e:2x2
jax: 0.10.0
libtpu: 0.0.40
codegen_flags: <defaults>
</compile_context>

<pallas_src>
import functools
import math

import jax
import jax.numpy as jnp
from jax.experimental import pallas as pl
from jax.experimental.pallas import tpu as pltpu

LANE = 128
SUBLANE = 8


def _round_up(x, m):
    return ((x + m - 1) // m) * m


def _pad2(a, rows, cols, dtype=None):
    out = jnp.pad(a, ((0, rows - a.shape[0]), (0, cols - a.shape[1])))
    return out.astype(dtype) if dtype is not None else out


def _pad3(a, d0, rows, cols, dtype=None):
    out = jnp.pad(
        a,
        ((0, d0 - a.shape[0]), (0, rows - a.shape[1]), (0, cols - a.shape[2])),
    )
    return out.astype(dtype) if dtype is not None else out


def _tpu_vmem_bytes():
    """Physical VMEM capacity (per TensorCore); falls back to 128 MiB."""
    try:
        return int(pltpu.get_tpu_info().vmem_capacity_bytes)
    except Exception:
        return 128 * 1024 * 1024


def _rgcn_defaults(vmem_cap):
    """Generation-aware (row_tile, k_tile, vmem_limit_bytes)."""
    if vmem_cap >= 96 * 1024 * 1024:
        # v5e / v6e: 128 MiB VMEM -> big row tiles, generous scoped limit.
        return 1024, 512, 64 * 1024 * 1024
    # v7x: 64 MiB VMEM per TC -> smaller tiles, leave headroom for the
    # compiler's internal scratch and output double-buffers.
    return 256, 512, 36 * 1024 * 1024


# ----------------------------------------------------------------------------
# Kernel 1: fused RGCN layer.
#   out[row_tile] = relu( sum_r sum_k adj[r][row_tile, k_tile] @ (X[k_tile] @ W[r]) + b_sum )
# grid = (row_tiles, num_rel, k_tiles): rows "parallel" (v7x megacore split),
# relation and K both "arbitrary" (reduction, f32 VMEM scratch accumulator).
# The feature transform X @ W[r] is fused per K-tile (no XW HBM round-trip).
# ----------------------------------------------------------------------------
def _rgcn_layer_kernel(adj_ref, x_ref, w_ref, b_ref, o_ref, acc_ref, *,
                       apply_relu):
    r = pl.program_id(1)
    k = pl.program_id(2)
    last = (r == pl.num_programs(1) - 1) & (k == pl.num_programs(2) - 1)

    @pl.when((r == 0) & (k == 0))
    def _():
        acc_ref[...] = jnp.zeros_like(acc_ref)

    # Fused per-relation feature transform for this K slab (bf16 MXU operands,
    # f32 accumulation; cast to bf16 to feed the aggregation matmul).
    xw = jnp.dot(
        x_ref[...], w_ref[...], preferred_element_type=jnp.float32
    ).astype(jnp.bfloat16)
    acc_ref[...] += jnp.dot(
        adj_ref[...], xw, preferred_element_type=jnp.float32
    )

    @pl.when(last)
    def _():
        out = acc_ref[...] + b_ref[...]
        if apply_relu:
            out = jnp.maximum(out, 0.0)
        o_ref[...] = out.astype(o_ref.dtype)


def rgcn_layer(adj, x, w, b_sum, *, apply_relu, row_tile, k_tile, vmem_limit):
    """adj: [R,N_p,N_p] bf16, x: [N_p,F_in_p] bf16, w: [R,F_in_p,F_out_p] bf16,
    b_sum: [1,F_out_p] f32 (sum of per-relation biases). Returns [N_p,F_out_p] bf16."""
    num_rel, n, _ = adj.shape
    f_in, f_out = w.shape[1], w.shape[2]
    assert n % row_tile == 0 and row_tile % SUBLANE == 0
    assert n % k_tile == 0 and k_tile % LANE == 0

    kernel = functools.partial(_rgcn_layer_kernel, apply_relu=apply_relu)
    return pl.pallas_call(
        kernel,
        out_shape=jax.ShapeDtypeStruct((n, f_out), jnp.bfloat16),
        grid_spec=pltpu.PrefetchScalarGridSpec(
            num_scalar_prefetch=0,
            grid=(n // row_tile, num_rel, n // k_tile),
            in_specs=[
                pl.BlockSpec((None, row_tile, k_tile), lambda i, r, k: (r, i, k)),
                pl.BlockSpec((k_tile, f_in), lambda i, r, k: (k, 0)),
                pl.BlockSpec((None, f_in, f_out), lambda i, r, k: (r, 0, 0)),
                pl.BlockSpec((1, f_out), lambda i, r, k: (0, 0)),
            ],
            out_specs=pl.BlockSpec((row_tile, f_out), lambda i, r, k: (i, 0)),
            scratch_shapes=[pltpu.VMEM((row_tile, f_out), jnp.float32)],
        ),
        compiler_params=pltpu.CompilerParams(
            dimension_semantics=("parallel", "arbitrary", "arbitrary"),
            vmem_limit_bytes=vmem_limit,
        ),
    )(adj, x, w, b_sum)


# ----------------------------------------------------------------------------
# Kernel 2: fused HeteroMLPPredictor.
#   score = [h[src] | h[dst]] @ [W_src; W_dst] + b
# The row gather is an MXU one-hot gather (iota == ids -> onehot @ h), so the
# MXU does the work instead of a serial 1-row copy loop; the two score matmuls
# are fused into a single K=2F dot. Edge tiles are independent -> "parallel".
# ----------------------------------------------------------------------------
def _edge_predictor_kernel(src_ref, dst_ref, h_ref, w_ref, b_ref, o_ref):
    n = h_ref.shape[0]
    t = src_ref.shape[0]
    col = jax.lax.broadcasted_iota(jnp.int32, (t, n), 1)
    one = jnp.float32(1.0)
    zero = jnp.float32(0.0)
    onehot_src = jnp.where(col == src_ref[...], one, zero).astype(h_ref.dtype)
    onehot_dst = jnp.where(col == dst_ref[...], one, zero).astype(h_ref.dtype)

    # MXU gather: exactly one 1.0 per row -> exact h rows (f32 accumulate).
    gsrc = jnp.dot(onehot_src, h_ref[...], preferred_element_type=jnp.float32)
    gdst = jnp.dot(onehot_dst, h_ref[...], preferred_element_type=jnp.float32)

    # Single K=2F matmul against the stacked [W_src; W_dst] weight.
    gcat = jnp.concatenate([gsrc, gdst], axis=1).astype(w_ref.dtype)
    score = jnp.dot(gcat, w_ref[...], preferred_element_type=jnp.float32)
    o_ref[...] = score + b_ref[...]


def edge_predictor(h, w_cat, b, src_idx, dst_idx, *, edge_tile, vmem_limit):
    """h: [N_p,F_p] bf16, w_cat: [2*F_p,C_p] bf16, b: [1,C_p] f32,
    src_idx/dst_idx: [E_p,1] int32 -> [E_p, C_p] f32."""
    n, f = h.shape
    two_f, c = w_cat.shape
    e = src_idx.shape[0]
    assert e % edge_tile == 0 and edge_tile % SUBLANE == 0
    assert two_f == 2 * f

    # TODO(synk): block-invariant operands (h, w_cat, b) are still
    # double-buffered by the default pipeline; single-buffering them would
    # halve their VMEM footprint for very large N.
    return pl.pallas_call(
        _edge_predictor_kernel,
        out_shape=jax.ShapeDtypeStruct((e, c), jnp.float32),
        grid_spec=pltpu.PrefetchScalarGridSpec(
            num_scalar_prefetch=0,
            grid=(e // edge_tile,),
            in_specs=[
                pl.BlockSpec((edge_tile, 1), lambda t: (t, 0)),
                pl.BlockSpec((edge_tile, 1), lambda t: (t, 0)),
                pl.BlockSpec((n, f), lambda t: (0, 0)),
                pl.BlockSpec((two_f, c), lambda t: (0, 0)),
                pl.BlockSpec((1, c), lambda t: (0, 0)),
            ],
            out_specs=pl.BlockSpec((edge_tile, c), lambda t: (t, 0)),
        ),
        compiler_params=pltpu.CompilerParams(
            dimension_semantics=("parallel",),
            vmem_limit_bytes=vmem_limit,
        ),
    )(src_idx, dst_idx, h, w_cat, b)


# ----------------------------------------------------------------------------
# Model glue: pad/cast once, run the Pallas pipeline, slice the padding off.
# ----------------------------------------------------------------------------
def model_forward(params, norm_adj, x, dec_src, dec_dst, *, row_tile=None,
                  k_tile=None, edge_tile=None):
    num_rel, num_nodes, _ = norm_adj.shape
    in_f = x.shape[1]
    hid_f = params["w1"].shape[2]
    out_f = params["w2"].shape[2]
    n_classes = params["wp"].shape[1]
    num_edges = dec_src.shape[0]

    vmem_cap = _tpu_vmem_bytes()
    d_row, d_k, vmem_limit = _rgcn_defaults(vmem_cap)

    n_lane = _round_up(num_nodes, LANE)
    if row_tile is None:
        row_tile = min(d_row, n_lane)
    if k_tile is None:
        k_tile = min(d_k, n_lane)
    n_p = _round_up(n_lane, math.lcm(row_tile, k_tile))
    in_p = _round_up(in_f, LANE)
    hid_p = _round_up(hid_f, LANE)
    out_p = _round_up(out_f, LANE)
    c_p = _round_up(n_classes, LANE)
    if edge_tile is None:
        edge_tile = min(256, _round_up(num_edges, SUBLANE))
    e_p = _round_up(num_edges, edge_tile)

    bf16 = jnp.bfloat16
    adj_p = _pad3(norm_adj, num_rel, n_p, n_p, bf16)
    x_p = _pad2(x, n_p, in_p, bf16)
    w1_p = _pad3(params["w1"], num_rel, in_p, hid_p, bf16)
    w2_p = _pad3(params["w2"], num_rel, hid_p, out_p, bf16)
    # Bias hoisted out of the per-relation accumulation (added once, in f32).
    # TODO(synk): assumes every relation's bias reaches every destination node
    # (densified homogeneous view), as in the dense reference.
    b1_sum = _pad2(params["b1"].sum(axis=0), 1, hid_p, jnp.float32)
    b2_sum = _pad2(params["b2"].sum(axis=0), 1, out_p, jnp.float32)

    # Predictor Linear(2F, C): stacked [W_src; W_dst], src half in rows
    # [0, out_p), dst half in rows [out_p, 2*out_p) to match the in-kernel concat.
    w_cat = jnp.zeros((2 * out_p, c_p), jnp.float32)
    w_cat = w_cat.at[:out_f, :n_classes].set(params["wp"][:out_f])
    w_cat = w_cat.at[out_p:out_p + out_f, :n_classes].set(params["wp"][out_f:])
    w_cat = w_cat.astype(bf16)
    bp_p = _pad2(params["bp"], 1, c_p, jnp.float32)

    src_p = jnp.pad(dec_src.astype(jnp.int32), (0, e_p - num_edges)).reshape(e_p, 1)
    dst_p = jnp.pad(dec_dst.astype(jnp.int32), (0, e_p - num_edges)).reshape(e_p, 1)

    h = rgcn_layer(adj_p, x_p, w1_p, b1_sum, apply_relu=True,
                   row_tile=row_tile, k_tile=k_tile, vmem_limit=vmem_limit)
    h = rgcn_layer(adj_p, h, w2_p, b2_sum, apply_relu=False,
                   row_tile=row_tile, k_tile=k_tile, vmem_limit=vmem_limit)
    scores_p = edge_predictor(h, w_cat, bp_p, src_p, dst_p,
                              edge_tile=edge_tile, vmem_limit=vmem_limit)
    return scores_p[:num_edges, :n_classes]


# ----------------------------------------------------------------------------
# Pure-JAX reference (mirrors the kernel's bf16 operand quantization so the
# tolerance check is tight and meaningful).
# ----------------------------------------------------------------------------
def reference_forward(params, norm_adj, x, dec_src, dec_dst):
    f32 = jnp.float32
    q = lambda a: a.astype(jnp.bfloat16).astype(f32)

    def layer(adj, xin, w, b, relu):
        adj_q = q(adj)
        x_q = q(xin)
        out = jnp.zeros((xin.shape[0], w.shape[2]), f32)
        for r in range(adj.shape[0]):
            xw = q(x_q @ q(w[r]))          # kernel feeds XW in bf16
            out = out + adj_q[r] @ xw
        out = out + b.sum(axis=0)
        if relu:
            out = jnp.maximum(out, 0.0)
        return q(out)                       # kernel stores h in bf16

    h = layer(norm_adj, x, params["w1"], params["b1"], True)
    h = layer(norm_adj, h, params["w2"], params["b2"], False)
    out_f = params["w2"].shape[2]
    hs, hd = h[dec_src], h[dec_dst]
    return hs @ q(params["wp"][:out_f]) + hd @ q(params["wp"][out_f:]) + params["bp"]


def build_normalized_adjacency(edge_lists, num_nodes):
    """edge_lists: list of (src, dst) index arrays, one per relation."""
    adjs = []
    for src, dst in edge_lists:
        a = jnp.zeros((num_nodes, num_nodes), jnp.float32)
        a = a.at[dst, src].add(1.0)  # A[dst, src]
        deg_out = jnp.clip(a.sum(axis=0), 1.0, None)  # out-degree of src nodes
        deg_in = jnp.clip(a.sum(axis=1), 1.0, None)   # in-degree of dst nodes
        norm = (deg_in ** -0.5)[:, None] * a * (deg_out ** -0.5)[None, :]
        adjs.append(norm)
    return jnp.stack(adjs, axis=0)


if __name__ == "__main__":
    # Small deterministic problem: 200 nodes (pads to 256 -> multiple row/K
    # tiles with the overrides below), 2 relations, 90 decoder edges.
    num_nodes = 200
    in_feats, hid_feats, out_feats = 8, 16, 8
    rel_names = ["rel0", "rel1"]
    num_rel = len(rel_names)
    n_classes = num_rel
    num_dec_edges = 90

    key = jax.random.PRNGKey(0)
    k_x, k_w1, k_b1, k_w2, k_b2, k_wp, k_bp = jax.random.split(key, 7)

    # Node features.
    x = jax.random.normal(k_x, (num_nodes, in_feats), jnp.float32)

    # Deterministic per-relation edge lists (ring-like graphs, no zero degrees).
    idx = jnp.arange(num_nodes)
    edge_lists = [
        (jnp.concatenate([idx, idx]),
         jnp.concatenate([(idx + 1) % num_nodes, (idx + 2) % num_nodes])),
        (idx, (idx + 3) % num_nodes),
    ]
    norm_adj = build_normalized_adjacency(edge_lists, num_nodes)

    # Decoder graph edges.
    e = jnp.arange(num_dec_edges)
    dec_src = e % num_nodes
    dec_dst = (5 * e + 3) % num_nodes

    # Deterministic parameter init (GraphConv weights/biases per relation,
    # predictor Linear(2*out_feats, n_classes)).
    def u(k, shape, fan_in):
        bound = 1.0 / jnp.sqrt(jnp.float32(fan_in))
        return jax.random.uniform(k, shape, jnp.float32, -bound, bound)

    params = {
        "w1": u(k_w1, (num_rel, in_feats, hid_feats), in_feats),
        "b1": u(k_b1, (num_rel, 1, hid_feats), in_feats),
        "w2": u(k_w2, (num_rel, hid_feats, out_feats), hid_feats),
        "b2": u(k_b2, (num_rel, 1, out_feats), hid_feats),
        "wp": u(k_wp, (2 * out_feats, n_classes), 2 * out_feats),
        "bp": u(k_bp, (1, n_classes), 2 * out_feats),
    }

    # row_tile=64 / k_tile=128 / edge_tile=32 exercise the full
    # (row "parallel", relation/K reduction) grid and multiple edge tiles even
    # at this toy size (N pads to 256 -> 4 row tiles x 2 relations x 2 K tiles).
    scores = model_forward(params, norm_adj, x, dec_src, dec_dst,
                           row_tile=64, k_tile=128, edge_tile=32)
    jax.block_until_ready(scores)

    ref = reference_forward(params, norm_adj, x, dec_src, dec_dst)
    assert scores.shape == (num_dec_edges, n_classes)
    assert jnp.allclose(scores, ref, atol=1e-3, rtol=1e-3), (
        float(jnp.max(jnp.abs(scores - ref))))

    print("KERNEL_OK")
</pallas_src>

<mosaic_0001>
module attributes {stable_mosaic.version = 11 : i64} {
  func.func @_rgcn_layer_kernel(%arg0: i32, %arg1: i32, %arg2: i32, %arg3: memref<1x64x128xbf16, #tpu.memory_space<vmem>>, %arg4: memref<128x128xbf16, #tpu.memory_space<vmem>>, %arg5: memref<1x128x128xbf16, #tpu.memory_space<vmem>>, %arg6: memref<1x128xf32, #tpu.memory_space<vmem>>, %arg7: memref<64x128xbf16, #tpu.memory_space<vmem>>, %arg8: memref<64x128xf32, #tpu.memory_space<vmem>>) attributes {dimension_semantics = [#tpu.dimension_semantics<parallel>, #tpu.dimension_semantics<arbitrary>, #tpu.dimension_semantics<arbitrary>], iteration_bounds = array<i64: 4, 2, 2>, scalar_prefetch = 0 : i64, scratch_operands = 1 : i64, tpu.core_type = #tpu.core_type<tc>, window_params = [{transform_indices = @transform_0, window_bounds = array<i64: 1, 64, 128>}, {transform_indices = @transform_1, window_bounds = array<i64: 128, 128>}, {transform_indices = @transform_2, window_bounds = array<i64: 1, 128, 128>}, {pipeline_mode = #tpu.pipeline_mode<synchronous>, transform_indices = @transform_3, window_bounds = array<i64: 1, 128>}, {transform_indices = @transform_4, window_bounds = array<i64: 64, 128>}]} {
    %c1_i32 = arith.constant 1 : i32
    %0 = arith.cmpi eq, %arg1, %c1_i32 : i32
    %c1_i32_0 = arith.constant 1 : i32
    %1 = arith.cmpi eq, %arg2, %c1_i32_0 : i32
    %2 = arith.andi %0, %1 : i1
    %c0_i32 = arith.constant 0 : i32
    %3 = arith.cmpi eq, %arg1, %c0_i32 : i32
    %c0_i32_1 = arith.constant 0 : i32
    %4 = arith.cmpi eq, %arg2, %c0_i32_1 : i32
    %5 = arith.andi %3, %4 : i1
    %6 = arith.extui %5 : i1 to i32
    %c0_i32_2 = arith.constant 0 : i32
    %7 = arith.cmpi ne, %6, %c0_i32_2 : i32
    scf.if %7 {
      %cst_16 = arith.constant 0.000000e+00 : f32
      %21 = vector.broadcast %cst_16 : f32 to vector<64x128xf32>
      %c0_17 = arith.constant 0 : index
      %c0_18 = arith.constant 0 : index
      %22 = vector.load %arg8[%c0_17, %c0_18] : memref<64x128xf32, #tpu.memory_space<vmem>>, vector<64x128xf32>
      tpu.vector_store %arg8[%c0_17, %c0_18], %21 {strides = array<i32>} : memref<64x128xf32, #tpu.memory_space<vmem>>, vector<64x128xf32>,
    } else {
    }
    %c0 = arith.constant 0 : index
    %c0_3 = arith.constant 0 : index
    %8 = vector.load %arg4[%c0, %c0_3] : memref<128x128xbf16, #tpu.memory_space<vmem>>, vector<128x128xbf16>
    %c0_4 = arith.constant 0 : index
    %c0_5 = arith.constant 0 : index
    %c0_6 = arith.constant 0 : index
    %9 = vector.load %arg5[%c0_4, %c0_5, %c0_6] : memref<1x128x128xbf16, #tpu.memory_space<vmem>>, vector<1x128x128xbf16>
    %10 = vector.shape_cast %9 : vector<1x128x128xbf16> to vector<128x128xbf16>
    %cst = arith.constant dense<0.000000e+00> : vector<128x128xf32>
    %11 = tpu.matmul %8, %10, %cst {dimension_numbers = #tpu.dot_dimension_numbers<[1], [0], [0], [1], [0, 0, 1, 1], [], []>} : vector<128x128xbf16>, vector<128x128xbf16>, vector<128x128xf32> -> vector<128x128xf32>
    %12 = arith.truncf %11 : vector<128x128xf32> to vector<128x128xbf16>
    %c0_7 = arith.constant 0 : index
    %c0_8 = arith.constant 0 : index
    %13 = vector.load %arg8[%c0_7, %c0_8] : memref<64x128xf32, #tpu.memory_space<vmem>>, vector<64x128xf32>
    %c0_9 = arith.constant 0 : index
    %c0_10 = arith.constant 0 : index
    %c0_11 = arith.constant 0 : index
    %14 = vector.load %arg3[%c0_9, %c0_10, %c0_11] : memref<1x64x128xbf16, #tpu.memory_space<vmem>>, vector<1x64x128xbf16>
    %15 = vector.shape_cast %14 : vector<1x64x128xbf16> to vector<64x128xbf16>
    %cst_12 = arith.constant dense<0.000000e+00> : vector<64x128xf32>
    %16 = tpu.matmul %15, %12, %cst_12 {dimension_numbers = #tpu.dot_dimension_numbers<[1], [0], [0], [1], [0, 0, 1, 1], [], []>} : vector<64x128xbf16>, vector<128x128xbf16>, vector<64x128xf32> -> vector<64x128xf32>
    %17 = arith.addf %13, %16 : vector<64x128xf32>
    %c0_13 = arith.constant 0 : index
    %c0_14 = arith.constant 0 : index
    %18 = vector.load %arg8[%c0_13, %c0_14] : memref<64x128xf32, #tpu.memory_space<vmem>>, vector<64x128xf32>
    tpu.vector_store %arg8[%c0_13, %c0_14], %17 {strides = array<i32>} : memref<64x128xf32, #tpu.memory_space<vmem>>, vector<64x128xf32>,
    %19 = arith.extui %2 : i1 to i32
    %c0_i32_15 = arith.constant 0 : i32
    %20 = arith.cmpi ne, %19, %c0_i32_15 : i32
    scf.if %20 {
      %c0_16 = arith.constant 0 : index
      %c0_17 = arith.constant 0 : index
      %21 = vector.load %arg8[%c0_16, %c0_17] : memref<64x128xf32, #tpu.memory_space<vmem>>, vector<64x128xf32>
      %c0_18 = arith.constant 0 : index
      %c0_19 = arith.constant 0 : index
      %22 = vector.load %arg6[%c0_18, %c0_19] : memref<1x128xf32, #tpu.memory_space<vmem>>, vector<1x128xf32>
      %23 = vector.broadcast %22 : vector<1x128xf32> to vector<64x128xf32>
      %24 = arith.addf %21, %23 : vector<64x128xf32>
      %cst_20 = arith.constant 0.000000e+00 : f32
      %25 = vector.broadcast %cst_20 : f32 to vector<64x128xf32>
      %26 = arith.maximumf %24, %25 : vector<64x128xf32>
      %27 = arith.truncf %26 : vector<64x128xf32> to vector<64x128xbf16>
      %c0_21 = arith.constant 0 : index
      %c0_22 = arith.constant 0 : index
      %28 = vector.load %arg7[%c0_21, %c0_22] : memref<64x128xbf16, #tpu.memory_space<vmem>>, vector<64x128xbf16>
      tpu.vector_store %arg7[%c0_21, %c0_22], %27 {strides = array<i32>} : memref<64x128xbf16, #tpu.memory_space<vmem>>, vector<64x128xbf16>,
    } else {
    }
    return
  }
  func.func @transform_0(%arg0: i32, %arg1: i32, %arg2: i32) -> (i32, i32, i32) {
    %c0_i32 = arith.constant 0 : i32
    return %arg1, %arg0, %arg2 : i32, i32, i32
  }
  func.func @transform_1(%arg0: i32, %arg1: i32, %arg2: i32) -> (i32, i32) {
    %c0_i32 = arith.constant 0 : i32
    %c0_i32_0 = arith.constant 0 : i32
    return %arg2, %c0_i32 : i32, i32
  }
  func.func @transform_2(%arg0: i32, %arg1: i32, %arg2: i32) -> (i32, i32, i32) {
    %c0_i32 = arith.constant 0 : i32
    %c0_i32_0 = arith.constant 0 : i32
    %c0_i32_1 = arith.constant 0 : i32
    return %arg1, %c0_i32, %c0_i32_0 : i32, i32, i32
  }
  func.func @transform_3(%arg0: i32, %arg1: i32, %arg2: i32) -> (i32, i32) {
    %c0_i32 = arith.constant 0 : i32
    %c0_i32_0 = arith.constant 0 : i32
    %c0_i32_1 = arith.constant 0 : i32
    return %c0_i32, %c0_i32_0 : i32, i32
  }
  func.func @transform_4(%arg0: i32, %arg1: i32, %arg2: i32) -> (i32, i32) {
    %c0_i32 = arith.constant 0 : i32
    %c0_i32_0 = arith.constant 0 : i32
    return %arg0, %c0_i32 : i32, i32
  }
}

</mosaic_0001>

<llo_original>
// kernel: tpu_custom_call.1
$region0: #{tpu_custom_call.1}
  #allocation0 [shape = 'u32[]', space=smem, size = 0x4, offset = 0x4, fixed_abs, tag = 'smem constant byte address 0x4 - core index']
  #allocation1 [shape = 'u32[72,128]{1,0:T(1,128)}', space=vmem, size = 0x9000, scoped, tag = 'internal scratch']
  #allocation2 [shape = 'f32[64,128]{1,0:T(8,128)}', space=vmem, size = 0x8000, scoped, tag = 'scratch operand']
  %s0 = inlined_call_operand.hbm [shape: bf16[2,256,256], index: 0, kind: input, shape index: {}]
  %s1 = inlined_call_operand.hbm [shape: bf16[256,128], index: 1, kind: input, shape index: {}]
  %s2 = inlined_call_operand.hbm [shape: bf16[2,128,128], index: 2, kind: input, shape index: {}]
  %s3 = inlined_call_operand.vmem [shape: f32[1,128], index: 3, kind: input, shape index: {}]
  %s4 = inlined_call_operand.hbm [shape: bf16[256,128], index: 4, kind: output, shape index: {}]
  %s5 = sld [smem:[#allocation0]]
  $region69: #{tpu_custom_call.1} parent=0
    _
  %s7 = ssub.s32 1, %s5
  %s8 = scalar_select 0, %s7, %s5
  $region1: #{tpu_custom_call.1} parent=0
    #allocation3 [shape = 'u8[32768]{0}', space=vmem, size = 0x8000, scoped, tag = 'input window, operand 0']
    #allocation4 [shape = 's32[2]{0}', space=sflag, size = 0x8, scoped, tag = 'scoped memory for tpu_custom_call.1']
    #allocation5 [shape = 's32[2]{0}', space=sflag, size = 0x8, scoped, tag = 'scoped memory for tpu_custom_call.1']
    #allocation6 [shape = 'u8[65536]{0}', space=vmem, size = 0x10000, scoped, tag = 'input window, operand 1']
    #allocation7 [shape = 's32[2]{0}', space=sflag, size = 0x8, scoped, tag = 'scoped memory for tpu_custom_call.1']
    #allocation8 [shape = 'u8[65536]{0}', space=vmem, size = 0x10000, scoped, tag = 'input window, operand 2']
    #allocation9 [shape = 'u8[32768]{0}', space=vmem, size = 0x8000, scoped, tag = 'output window, operand 0']
    %9 = vsyncpa [#allocation4], 0
    %s10 = scalar_lea.sflag [#allocation4], 1
    %11 = vsyncpa %s10, 0
    %12 = vsyncpa [#allocation7], 0
    %s13 = scalar_lea.sflag [#allocation7], 1
    %14 = vsyncpa %s13, 0
    %15 = vsyncpa [#allocation5], 0
    %s16 = scalar_lea.sflag [#allocation5], 1
    %17 = vsyncpa %s16, 0
    loop: start=0, step=1, limit=18
    $region2: #{tpu_custom_call.1} parent=1 // loop_pre_header
      _
    $region3: #{tpu_custom_call.1} parent=1 // loop_header
      %s19 = sphi 0, %s23
      %p20 = scmp.ge.s32.totalorder %s19, 18
      %s26 = sphi 0, %s45
      %s27 = sphi 0, %s41
      %s28 = sphi 0, %s37
      %s29 = sphi 0, %s26
      %s30 = sphi 0, %s27
      %s31 = sphi 0, %s28
      %s32 = sphi 0, %s29
      %s33 = sphi 0, %s30
      %s34 = sphi 0, %s31
      %s52 = sphi 0, %s54
      %s55 = sphi 0, %s52
      %s56 = sphi 0, %s55
      %s72 = sphi 0, %s56
      %s78 = sphi 0, %s80
      %s81 = sphi 0, %s78
      %s82 = sphi 0, %s81
      %s98 = sphi 0, %s82
      %s104 = sphi 0, %s106
      %s107 = sphi 0, %s104
      %s108 = sphi 0, %s107
      %s124 = sphi 0, %s108
      %s128 = sphi 0, %s128
      %s130 = sphi 0, %s128
      %s131 = sphi 0, %s130
      %s145 = sphi 0, %s131
      %s151 = sphi 0, %s153
      %s154 = sphi 0, %s151
      %s155 = sphi 0, %s154
      %s171 = sphi 0, %s155
    $region4: #{tpu_custom_call.1} parent=1 // loop_header_branch
      %22 = sbr.rel (%p20) target = $region8
    $region5: #{tpu_custom_call.1} parent=1 // loop_body
      %s24 = ssub.s32 %s19, 1
      %s25 = ssub.s32 %s19, 2
      %s35 = sadd.s32 1, %s28
      %p36 = scmp.ge.s32.totalorder %s35, 2
      %s37 = scalar_select %p36, 0, %s35
      %s38 = sadd.s32 1, %s27
      %s39 = scalar_select %p36, %s38, %s27
      %p40 = scmp.ge.s32.totalorder %s39, 2
      %s41 = scalar_select %p40, 0, %s39
      %s42 = sadd.s32 1, %s26
      %s43 = scalar_select %p40, %s42, %s26
      %p44 = scmp.ge.s32.totalorder %s43, 4
      %s45 = scalar_select %p44, 0, %s43
      %s46 = ssub.s32 %s27, %s41
      %s47 = ssub.s32 %s26, %s45
      %s48 = sor.u32 %s46, %s47
      %s49 = ssub.s32 %s28, %s37
      %s50 = sor.u32 %s48, %s49
      %p51 = scmp.eq.s32.totalorder %s50, 0
      %s53 = sadd.s32 %s52, 1
      %s54 = scalar_select %p51, %s52, %s53
      %p57 = pneg %p51
      %p58 = scmp.eq.s32.totalorder %s19, 15
      %p59 = por %p57, %p58
      %p60 = scmp.ne.s32.totalorder %s52, %s55
      %p61 = scmp.eq.s32.totalorder %s19, 0
      %p62 = por %p60, %p61
      %p63 = scmp.ne.s32.totalorder %s52, %s55
      %p64 = scmp.eq.s32.totalorder %s24, 15
      %p65 = por %p63, %p64
      %p66 = scmp.ne.s32.totalorder %s55, %s56
      %p67 = scmp.eq.s32.totalorder %s24, 0
      %p68 = por %p66, %p67
      %p69 = scmp.ne.s32.totalorder %s55, %s56
      %p70 = scmp.eq.s32.totalorder %s25, 15
      %p71 = por %p69, %p70
      %p73 = scmp.ne.s32.totalorder %s56, %s72
      %p74 = scmp.eq.s32.totalorder %s25, 0
      %p75 = por %p73, %p74
      %s76 = ssub.s32 %s28, %s37
      %p77 = scmp.eq.s32.totalorder %s76, 0
      %s79 = sadd.s32 %s78, 1
      %s80 = scalar_select %p77, %s78, %s79
      %p83 = pneg %p77
      %p84 = scmp.eq.s32.totalorder %s19, 15
      %p85 = por %p83, %p84
      %p86 = scmp.ne.s32.totalorder %s78, %s81
      %p87 = scmp.eq.s32.totalorder %s19, 0
      %p88 = por %p86, %p87
      %p89 = scmp.ne.s32.totalorder %s78, %s81
      %p90 = scmp.eq.s32.totalorder %s24, 15
      %p91 = por %p89, %p90
      %p92 = scmp.ne.s32.totalorder %s81, %s82
      %p93 = scmp.eq.s32.totalorder %s24, 0
      %p94 = por %p92, %p93
      %p95 = scmp.ne.s32.totalorder %s81, %s82
      %p96 = scmp.eq.s32.totalorder %s25, 15
      %p97 = por %p95, %p96
      %p99 = scmp.ne.s32.totalorder %s82, %s98
      %p100 = scmp.eq.s32.totalorder %s25, 0
      %p101 = por %p99, %p100
      %s102 = ssub.s32 %s27, %s41
      %p103 = scmp.eq.s32.totalorder %s102, 0
      %s105 = sadd.s32 %s104, 1
      %s106 = scalar_select %p103, %s104, %s105
      %p109 = pneg %p103
      %p110 = scmp.eq.s32.totalorder %s19, 15
      %p111 = por %p109, %p110
      %p112 = scmp.ne.s32.totalorder %s104, %s107
      %p113 = scmp.eq.s32.totalorder %s19, 0
      %p114 = por %p112, %p113
      %p115 = scmp.ne.s32.totalorder %s104, %s107
      %p116 = scmp.eq.s32.totalorder %s24, 15
      %p117 = por %p115, %p116
      %p118 = scmp.ne.s32.totalorder %s107, %s108
      %p119 = scmp.eq.s32.totalorder %s24, 0
      %p120 = por %p118, %p119
      %p121 = scmp.ne.s32.totalorder %s107, %s108
      %p122 = scmp.eq.s32.totalorder %s25, 15
      %p123 = por %p121, %p122
      %p125 = scmp.ne.s32.totalorder %s108, %s124
      %p126 = scmp.eq.s32.totalorder %s25, 0
      %p127 = por %p125, %p126
      %s129 = sadd.s32 %s128, 1
      %p132 = scmp.eq.s32.totalorder %s19, 15
      %p133 = scmp.ne.s32.totalorder %s128, %s130
      %p134 = scmp.eq.s32.totalorder %s19, 0
      %p135 = por %p133, %p134
      %p136 = scmp.ne.s32.totalorder %s128, %s130
      %p137 = scmp.eq.s32.totalorder %s24, 15
      %p138 = por %p136, %p137
      %p139 = scmp.ne.s32.totalorder %s130, %s131
      %p140 = scmp.eq.s32.totalorder %s24, 0
      %p141 = por %p139, %p140
      %p142 = scmp.ne.s32.totalorder %s130, %s131
      %p143 = scmp.eq.s32.totalorder %s25, 15
      %p144 = por %p142, %p143
      %p146 = scmp.ne.s32.totalorder %s131, %s145
      %p147 = scmp.eq.s32.totalorder %s25, 0
      %p148 = por %p146, %p147
      %s149 = ssub.s32 %s26, %s45
      %p150 = scmp.eq.s32.totalorder %s149, 0
      %s152 = sadd.s32 %s151, 1
      %s153 = scalar_select %p150, %s151, %s152
      %p156 = pneg %p150
      %p157 = scmp.eq.s32.totalorder %s19, 15
      %p158 = por %p156, %p157
      %p159 = scmp.ne.s32.totalorder %s151, %s154
      %p160 = scmp.eq.s32.totalorder %s19, 0
      %p161 = por %p159, %p160
      %p162 = scmp.ne.s32.totalorder %s151, %s154
      %p163 = scmp.eq.s32.totalorder %s24, 15
      %p164 = por %p162, %p163
      %p165 = scmp.ne.s32.totalorder %s154, %s155
      %p166 = scmp.eq.s32.totalorder %s24, 0
      %p167 = por %p165, %p166
      %p168 = scmp.ne.s32.totalorder %s154, %s155
      %p169 = scmp.eq.s32.totalorder %s25, 15
      %p170 = por %p168, %p169
      %p172 = scmp.ne.s32.totalorder %s155, %s171
      %p173 = scmp.eq.s32.totalorder %s25, 0
      %p174 = por %p172, %p173
      %p175 = scmp.le.s32.totalorder 1, %s19
      %p176 = scmp.lt.s32.totalorder %s19, 17
      %p177 = pnand %p175, %p176
      %p178 = pneg %p177
      // Predicated region
      $region9: #{tpu_custom_call.1} parent=5 // pred_check
        _
      $region10: #{tpu_custom_call.1} parent=5 // pred_check_branch
        %180 = sbr.rel (%p177) target = $region12
      $region11: #{tpu_custom_call.1} parent=5 // pred_region
        %s181 = ssub.s32 %s19, 1
        // Predicated region
        $region13: #{tpu_custom_call.1} parent=11 // pred_check
          %p182 = pneg %p141
        $region14: #{tpu_custom_call.1} parent=11 // pred_check_branch
          %184 = sbr.rel (%p182) target = $region16
        $region15: #{tpu_custom_call.1} parent=11 // pred_region
          _
        $region16: #{tpu_custom_call.1} parent=11 // pred_fallthru
          _
      $region12: #{tpu_custom_call.1} parent=5 // pred_fallthru
        _
      %p185 = scmp.lt.s32.totalorder %s19, 16
      // Predicated region
      $region17: #{tpu_custom_call.1} parent=5 // pred_check
        %p186 = pneg %p185
      $region18: #{tpu_custom_call.1} parent=5 // pred_check_branch
        %188 = sbr.rel (%p186) target = $region20
      $region19: #{tpu_custom_call.1} parent=5 // pred_region
        // Predicated region
        $region21: #{tpu_custom_call.1} parent=19 // pred_check
          %p189 = pneg %p62
        $region22: #{tpu_custom_call.1} parent=19 // pred_check_branch
          %191 = sbr.rel (%p189) target = $region24
        $region23: #{tpu_custom_call.1} parent=19 // pred_region
          %s192 = sand.u32 %s52, 1
          %s193 = scalar_lea.sflag [#allocation4], %s192
          %s194 = sand.u32 %s52, 1
          %s195 = smul.addr %s194, 32
          %s196 = scalar_lea.vmem [#allocation3], %s195
          %s197 = smul.u32 8, %s26
          %199 = vsyncadd %s193, 0
          %s200 = smul.addr %s197, 2
          %s201 = sadd.s32 %s28, %s200
          %s202 = smul.addr %s27, 64
          %s203 = sadd.s32 %s201, %s202
          %s204 = smul.addr %s203, 4
          %s205 = scalar_lea.hbm %s0, %s204
          %s206 = sshll.u32 %s205, 4
          %s207 = int_to_ptr.hbm [resolvable:$true] %s206
          %s208 = sshll.u32 %s196, 4
          %s209 = int_to_ptr.vmem [resolvable:$true] %s208
          %214 = dma.hbm_to_vmem [thread:$0]  %s207, 512, %s209, %s193, 128, 64, 4
        $region24: #{tpu_custom_call.1} parent=19 // pred_fallthru
          _
        // Predicated region
        $region25: #{tpu_custom_call.1} parent=19 // pred_check
          %p215 = pneg %p88
        $region26: #{tpu_custom_call.1} parent=19 // pred_check_branch
          %217 = sbr.rel (%p215) target = $region28
        $region27: #{tpu_custom_call.1} parent=19 // pred_region
          %s218 = sand.u32 %s19, 1
          %s219 = scalar_lea.sflag [#allocation7], %s218
          %s220 = sand.u32 %s78, 1
          %s221 = smul.addr %s220, 64
          %s222 = scalar_lea.vmem [#allocation6], %s221
          %s223 = smul.u32 16, %s28
          %225 = vsyncadd %s219, 0
          %s226 = smul.addr %s223, 4
          %s227 = scalar_lea.hbm %s1, %s226
          %s228 = sshll.u32 %s227, 4
          %s229 = int_to_ptr.hbm [resolvable:$true] %s228
          %s230 = sshll.u32 %s222, 4
          %s231 = int_to_ptr.vmem [resolvable:$true] %s230
          %236 = dma.hbm_to_vmem [thread:$0]  %s229, 1024, %s231, %s219, 64, 64, 4
        $region28: #{tpu_custom_call.1} parent=19 // pred_fallthru
          _
        // Predicated region
        $region29: #{tpu_custom_call.1} parent=19 // pred_check
          %p237 = pneg %p114
        $region30: #{tpu_custom_call.1} parent=19 // pred_check_branch
          %239 = sbr.rel (%p237) target = $region32
        $region31: #{tpu_custom_call.1} parent=19 // pred_region
          %s240 = sand.u32 %s19, 1
          %s241 = scalar_lea.sflag [#allocation7], %s240
          %s242 = sand.u32 %s104, 1
          %s243 = smul.addr %s242, 64
          %s244 = scalar_lea.vmem [#allocation8], %s243
          %246 = vsyncadd %s241, 0
          %s247 = smul.addr %s27, 16
          %s248 = smul.addr %s247, 4
          %s249 = scalar_lea.hbm %s2, %s248
          %s250 = sshll.u32 %s249, 4
          %s251 = int_to_ptr.hbm [resolvable:$true] %s250
          %s252 = sshll.u32 %s244, 4
          %s253 = int_to_ptr.vmem [resolvable:$true] %s252
          %258 = dma.hbm_to_vmem [thread:$0]  %s251, 1024, %s253, %s241, 64, 64, 4
        $region32: #{tpu_custom_call.1} parent=19 // pred_fallthru
          _
      $region20: #{tpu_custom_call.1} parent=5 // pred_fallthru
        _
      %p259 = scmp.le.s32.totalorder 1, %s19
      %p260 = scmp.lt.s32.totalorder %s19, 17
      %p261 = pnand %p259, %p260
      %p262 = pneg %p261
      // Predicated region
      $region33: #{tpu_custom_call.1} parent=5 // pred_check
        _
      $region34: #{tpu_custom_call.1} parent=5 // pred_check_branch
        %264 = sbr.rel (%p261) target = $region36
      $region35: #{tpu_custom_call.1} parent=5 // pred_region
        %s265 = ssub.s32 %s19, 1
        %s266 = sand.u32 %s55, 1
        %s267 = scalar_lea.sflag [#allocation4], %s266
        %s268 = sand.u32 %s55, 1
        %s269 = smul.addr %s268, 32
        %s270 = scalar_lea.vmem [#allocation3], %s269
        // Predicated region
        $region37: #{tpu_custom_call.1} parent=35 // pred_check
          %p271 = pneg %p68
        $region38: #{tpu_custom_call.1} parent=35 // pred_check_branch
          %273 = sbr.rel (%p271) target = $region40
        $region39: #{tpu_custom_call.1} parent=35 // pred_region
          %275 = dma.done %s267, 512
        $region40: #{tpu_custom_call.1} parent=35 // pred_fallthru
          _
        %s276 = sand.u32 %s24, 1
        %s277 = scalar_lea.sflag [#allocation7], %s276
        %s278 = sand.u32 %s81, 1
        %s279 = smul.addr %s278, 64
        %s280 = scalar_lea.vmem [#allocation6], %s279
        // Predicated region
        $region41: #{tpu_custom_call.1} parent=35 // pred_check
          %p281 = pneg %p94
        $region42: #{tpu_custom_call.1} parent=35 // pred_check_branch
          %283 = sbr.rel (%p281) target = $region44
        $region43: #{tpu_custom_call.1} parent=35 // pred_region
          %285 = dma.done %s277, 1024
        $region44: #{tpu_custom_call.1} parent=35 // pred_fallthru
          _
        %s286 = sand.u32 %s24, 1
        %s287 = scalar_lea.sflag [#allocation7], %s286
        %s288 = sand.u32 %s107, 1
        %s289 = smul.addr %s288, 64
        %s290 = scalar_lea.vmem [#allocation8], %s289
        // Predicated region
        $region45: #{tpu_custom_call.1} parent=35 // pred_check
          %p291 = pneg %p120
        $region46: #{tpu_custom_call.1} parent=35 // pred_check_branch
          %293 = sbr.rel (%p291) target = $region48
        $region47: #{tpu_custom_call.1} parent=35 // pred_region
          %295 = dma.done %s287, 1024
        $region48: #{tpu_custom_call.1} parent=35 // pred_fallthru
          _
        %s296 = sand.u32 %s55, 1
        %s297 = scalar_lea.sflag [#allocation4], %s296
        %s298 = sand.u32 %s55, 1
        %s299 = smul.addr %s298, 32
        %s300 = scalar_lea.vmem [#allocation3], %s299
        %p301 = pneg %p68
        %p302 = pneg %p65
        %s303 = sand.u32 %s24, 1
        %s304 = scalar_lea.sflag [#allocation7], %s303
        %s305 = sand.u32 %s81, 1
        %s306 = smul.addr %s305, 64
        %s307 = scalar_lea.vmem [#allocation6], %s306
        %p308 = pneg %p94
        %p309 = pneg %p91
        %s310 = sand.u32 %s24, 1
        %s311 = scalar_lea.sflag [#allocation7], %s310
        %s312 = sand.u32 %s107, 1
        %s313 = smul.addr %s312, 64
        %s314 = scalar_lea.vmem [#allocation8], %s313
        %p315 = pneg %p120
        %p316 = pneg %p117
        %p317 = pneg %p141
        %p318 = pneg %p138
        %p319 = pneg %p167
        %p320 = pneg %p164
        %s321 = sand.u32 %s154, 1
        %s322 = scalar_lea.sflag [#allocation5], %s321
        %s323 = sand.u32 %s154, 1
        %s324 = smul.addr %s323, 32
        %s325 = scalar_lea.vmem [#allocation9], %s324
        %s326 = smul.u32 8, %s29
        %s327 = smul.u32 16, %s31
        %s328 = smul.u32 8, %s29
        %p329 = scmp.eq.s32.totalorder %s30, 1
        %p330 = scmp.eq.s32.totalorder %s31, 1
        %p331 = pnand %p329, %p330
        %p332 = pneg %p331
        %p333 = scmp.eq.s32.totalorder %s30, 0
        %p334 = scmp.eq.s32.totalorder %s31, 0
        %p335 = pnand %p333, %p334
        %p336 = pneg %p335
        // Predicated region
        $region49: #{tpu_custom_call.1} parent=35 // pred_check
          _
        $region50: #{tpu_custom_call.1} parent=35 // pred_check_branch
          %338 = sbr.rel (%p335) target = $region52
        $region51: #{tpu_custom_call.1} parent=35 // pred_region
          %339 = vst [vmem:[#allocation2] sm:$0xff] 0.0
          %340 = vst [vmem:[#allocation2 + $0x8] sm:$0xff] 0.0
          %341 = vst [vmem:[#allocation2 + $0x10] sm:$0xff] 0.0
          %342 = vst [vmem:[#allocation2 + $0x18] sm:$0xff] 0.0
          %343 = vst [vmem:[#allocation2 + $0x20] sm:$0xff] 0.0
          %344 = vst [vmem:[#allocation2 + $0x28] sm:$0xff] 0.0
          %345 = vst [vmem:[#allocation2 + $0x30] sm:$0xff] 0.0
          %346 = vst [vmem:[#allocation2 + $0x38] sm:$0xff] 0.0
        $region52: #{tpu_custom_call.1} parent=35 // pred_fallthru
          _
        %v347 = vld [vmem:[%s280] sm:$0xf]
        %v348 = vld [vmem:[%s280 + $0x4] sm:$0xf]
        %v349 = vld [vmem:[%s280 + $0x8] sm:$0xf]
        %v350 = vld [vmem:[%s280 + $0xc] sm:$0xf]
        %v351 = vld [vmem:[%s280 + $0x10] sm:$0xf]
        %v352 = vld [vmem:[%s280 + $0x14] sm:$0xf]
        %v353 = vld [vmem:[%s280 + $0x18] sm:$0xf]
        %v354 = vld [vmem:[%s280 + $0x1c] sm:$0xf]
        %v355 = vld [vmem:[%s280 + $0x20] sm:$0xf]
        %v356 = vld [vmem:[%s280 + $0x24] sm:$0xf]
        %v357 = vld [vmem:[%s280 + $0x28] sm:$0xf]
        %v358 = vld [vmem:[%s280 + $0x2c] sm:$0xf]
        %v359 = vld [vmem:[%s280 + $0x30] sm:$0xf]
        %v360 = vld [vmem:[%s280 + $0x34] sm:$0xf]
        %v361 = vld [vmem:[%s280 + $0x38] sm:$0xf]
        %v362 = vld [vmem:[%s280 + $0x3c] sm:$0xf]
        %v363 = vld [vmem:[%s290] sm:$0xf]
        %v364 = vld [vmem:[%s290 + $0x4] sm:$0xf]
        %v365 = vld [vmem:[%s290 + $0x8] sm:$0xf]
        %v366 = vld [vmem:[%s290 + $0xc] sm:$0xf]
        %v367 = vld [vmem:[%s290 + $0x10] sm:$0xf]
        %v368 = vld [vmem:[%s290 + $0x14] sm:$0xf]
        %v369 = vld [vmem:[%s290 + $0x18] sm:$0xf]
        %v370 = vld [vmem:[%s290 + $0x1c] sm:$0xf]
        %v371 = vld [vmem:[%s290 + $0x20] sm:$0xf]
        %v372 = vld [vmem:[%s290 + $0x24] sm:$0xf]
        %v373 = vld [vmem:[%s290 + $0x28] sm:$0xf]
        %v374 = vld [vmem:[%s290 + $0x2c] sm:$0xf]
        %v375 = vld [vmem:[%s290 + $0x30] sm:$0xf]
        %v376 = vld [vmem:[%s290 + $0x34] sm:$0xf]
        %v377 = vld [vmem:[%s290 + $0x38] sm:$0xf]
        %v378 = vld [vmem:[%s290 + $0x3c] sm:$0xf]
        %v395 = vunpack.c.l.b16 %v347
        %v396 = vunpack.c.l.b16 %v348
        %v397 = vunpack.c.l.b16 %v349
        %v398 = vunpack.c.l.b16 %v350
        %v399 = vunpack.c.l.b16 %v351
        %v400 = vunpack.c.l.b16 %v352
        %v401 = vunpack.c.l.b16 %v353
        %v402 = vunpack.c.l.b16 %v354
        %v403 = vunpack.c.l.b16 %v355
        %v404 = vunpack.c.l.b16 %v356
        %v405 = vunpack.c.l.b16 %v357
        %v406 = vunpack.c.l.b16 %v358
        %v407 = vunpack.c.l.b16 %v359
        %v408 = vunpack.c.l.b16 %v360
        %v409 = vunpack.c.l.b16 %v361
        %v410 = vunpack.c.l.b16 %v362
        %v411 = vpack.c.b16 %v396, %v395
        %v412 = vpack.c.b16 %v398, %v397
        %v413 = vpack.c.b16 %v400, %v399
        %v414 = vpack.c.b16 %v402, %v401
        %v415 = vpack.c.b16 %v404, %v403
        %v416 = vpack.c.b16 %v406, %v405
        %v417 = vpack.c.b16 %v408, %v407
        %v418 = vpack.c.b16 %v410, %v409
        %v443 = vunpack.c.l.b16 %v363
        %v444 = vunpack.c.l.b16 %v364
        %v445 = vunpack.c.l.b16 %v365
        %v446 = vunpack.c.l.b16 %v366
        %v447 = vunpack.c.l.b16 %v367
        %v448 = vunpack.c.l.b16 %v368
        %v449 = vunpack.c.l.b16 %v369
        %v450 = vunpack.c.l.b16 %v370
        %v451 = vunpack.c.l.b16 %v371
        %v452 = vunpack.c.l.b16 %v372
        %v453 = vunpack.c.l.b16 %v373
        %v454 = vunpack.c.l.b16 %v374
        %v455 = vunpack.c.l.b16 %v375
        %v456 = vunpack.c.l.b16 %v376
        %v457 = vunpack.c.l.b16 %v377
        %v458 = vunpack.c.l.b16 %v378
        %v459 = vpack.c.b16 %v444, %v443
        %v460 = vpack.c.b16 %v446, %v445
        %v461 = vpack.c.b16 %v448, %v447
        %v462 = vpack.c.b16 %v450, %v449
        %v463 = vpack.c.b16 %v452, %v451
        %v464 = vpack.c.b16 %v454, %v453
        %v465 = vpack.c.b16 %v456, %v455
        %v466 = vpack.c.b16 %v458, %v457
        %475 = vmatpush.bf16.msra.mxu0 %v466
        %476 = vmatpush.bf16.msra.mxu0 %v465
        %477 = vmatpush.bf16.msra.mxu0 %v464
        %478 = vmatpush.bf16.msra.mxu0 %v463
        %479 = vmatpush.bf16.msra.mxu0 %v462
        %480 = vmatpush.bf16.msra.mxu0 %v461
        %481 = vmatpush.bf16.msra.mxu0 %v460
        %482 = vmatpush.bf16.msra.mxu0 %v459
        %483 = vmatmul.bf16.gmra.mxu0 %v411
        %v484 = vpop.f32.mrf.mxu0
        %v485 = vadd.f32 0.0, %v484
        %v486 = vpop.f32.mrf.mxu0
        %v487 = vadd.f32 0.0, %v486
        %488 = vmatmul.bf16.gmra.mxu0 %v412
        %v489 = vpop.f32.mrf.mxu0
        %v490 = vadd.f32 0.0, %v489
        %v491 = vpop.f32.mrf.mxu0
        %v492 = vadd.f32 0.0, %v491
        %493 = vmatmul.bf16.gmra.mxu0 %v413
        %v494 = vpop.f32.mrf.mxu0
        %v495 = vadd.f32 0.0, %v494
        %v496 = vpop.f32.mrf.mxu0
        %v497 = vadd.f32 0.0, %v496
        %498 = vmatmul.bf16.gmra.mxu0 %v414
        %v499 = vpop.f32.mrf.mxu0
        %v500 = vadd.f32 0.0, %v499
        %v501 = vpop.f32.mrf.mxu0
        %v502 = vadd.f32 0.0, %v501
        %503 = vmatmul.bf16.gmra.mxu0 %v415
        %v504 = vpop.f32.mrf.mxu0
        %v505 = vadd.f32 0.0, %v504
        %v506 = vpop.f32.mrf.mxu0
        %v507 = vadd.f32 0.0, %v506
        %508 = vmatmul.bf16.gmra.mxu0 %v416
        %v509 = vpop.f32.mrf.mxu0
        %v510 = vadd.f32 0.0, %v509
        %v511 = vpop.f32.mrf.mxu0
        %v512 = vadd.f32 0.0, %v511
        %513 = vmatmul.bf16.gmra.mxu0 %v417
        %v514 = vpop.f32.mrf.mxu0
        %v515 = vadd.f32 0.0, %v514
        %v516 = vpop.f32.mrf.mxu0
        %v517 = vadd.f32 0.0, %v516
        %518 = vmatmul.bf16.gmra.mxu0 %v418
        %v519 = vpop.f32.mrf.mxu0
        %v520 = vadd.f32 0.0, %v519
        %v521 = vpop.f32.mrf.mxu0
        %v522 = vadd.f32 0.0, %v521
        %523 = vdwg.mxu0
        %v524 = vpack.c.bf16 %v487, %v485
        %v525 = vpack.c.bf16 %v492, %v490
        %v526 = vpack.c.bf16 %v497, %v495
        %v527 = vpack.c.bf16 %v502, %v500
        %v528 = vpack.c.bf16 %v507, %v505
        %v529 = vpack.c.bf16 %v512, %v510
        %v530 = vpack.c.bf16 %v517, %v515
        %v531 = vpack.c.bf16 %v522, %v520
        %v532 = vld [vmem:[#allocation2] sm:$0xff]
        %v533 = vld [vmem:[#allocation2 + $0x8] sm:$0xff]
        %v534 = vld [vmem:[#allocation2 + $0x10] sm:$0xff]
        %v535 = vld [vmem:[#allocation2 + $0x18] sm:$0xff]
        %v536 = vld [vmem:[#allocation2 + $0x20] sm:$0xff]
        %v537 = vld [vmem:[#allocation2 + $0x28] sm:$0xff]
        %v538 = vld [vmem:[#allocation2 + $0x30] sm:$0xff]
        %v539 = vld [vmem:[#allocation2 + $0x38] sm:$0xff]
        %v540 = vld [vmem:[%s270] sm:$0xf]
        %v541 = vld [vmem:[%s270 + $0x4] sm:$0xf]
        %v542 = vld [vmem:[%s270 + $0x8] sm:$0xf]
        %v543 = vld [vmem:[%s270 + $0xc] sm:$0xf]
        %v544 = vld [vmem:[%s270 + $0x10] sm:$0xf]
        %v545 = vld [vmem:[%s270 + $0x14] sm:$0xf]
        %v546 = vld [vmem:[%s270 + $0x18] sm:$0xf]
        %v547 = vld [vmem:[%s270 + $0x1c] sm:$0xf]
        %v556 = vunpack.c.l.b16 %v540
        %v557 = vunpack.c.l.b16 %v541
        %v558 = vunpack.c.l.b16 %v542
        %v559 = vunpack.c.l.b16 %v543
        %v560 = vunpack.c.l.b16 %v544
        %v561 = vunpack.c.l.b16 %v545
        %v562 = vunpack.c.l.b16 %v546
        %v563 = vunpack.c.l.b16 %v547
        %v564 = vpack.c.b16 %v557, %v556
        %v565 = vpack.c.b16 %v559, %v558
        %v566 = vpack.c.b16 %v561, %v560
        %v567 = vpack.c.b16 %v563, %v562
        %572 = vmatpush.bf16.msra.mxu0 %v531
        %573 = vmatpush.bf16.msra.mxu0 %v530
        %574 = vmatpush.bf16.msra.mxu0 %v529
        %575 = vmatpush.bf16.msra.mxu0 %v528
        %576 = vmatpush.bf16.msra.mxu0 %v527
        %577 = vmatpush.bf16.msra.mxu0 %v526
        %578 = vmatpush.bf16.msra.mxu0 %v525
        %579 = vmatpush.bf16.msra.mxu0 %v524
        %580 = vmatmul.bf16.gmra.mxu0 %v564
        %v581 = vpop.f32.mrf.mxu0
        %v582 = vadd.f32 0.0, %v581
        %v583 = vpop.f32.mrf.mxu0
        %v584 = vadd.f32 0.0, %v583
        %585 = vmatmul.bf16.gmra.mxu0 %v565
        %v586 = vpop.f32.mrf.mxu0
        %v587 = vadd.f32 0.0, %v586
        %v588 = vpop.f32.mrf.mxu0
        %v589 = vadd.f32 0.0, %v588
        %590 = vmatmul.bf16.gmra.mxu0 %v566
        %v591 = vpop.f32.mrf.mxu0
        %v592 = vadd.f32 0.0, %v591
        %v593 = vpop.f32.mrf.mxu0
        %v594 = vadd.f32 0.0, %v593
        %595 = vmatmul.bf16.gmra.mxu0 %v567
        %v596 = vpop.f32.mrf.mxu0
        %v597 = vadd.f32 0.0, %v596
        %v598 = vpop.f32.mrf.mxu0
        %v599 = vadd.f32 0.0, %v598
        %600 = vdwg.mxu0
        %v601 = vadd.f32 %v532, %v582
        %v602 = vadd.f32 %v533, %v584
        %v603 = vadd.f32 %v534, %v587
        %v604 = vadd.f32 %v535, %v589
        %v605 = vadd.f32 %v536, %v592
        %v606 = vadd.f32 %v537, %v594
        %v607 = vadd.f32 %v538, %v597
        %v608 = vadd.f32 %v539, %v599
        %609 = vst [vmem:[#allocation2] sm:$0xff] %v601
        %610 = vst [vmem:[#allocation2 + $0x8] sm:$0xff] %v602
        %611 = vst [vmem:[#allocation2 + $0x10] sm:$0xff] %v603
        %612 = vst [vmem:[#allocation2 + $0x18] sm:$0xff] %v604
        %613 = vst [vmem:[#allocation2 + $0x20] sm:$0xff] %v605
        %614 = vst [vmem:[#allocation2 + $0x28] sm:$0xff] %v606
        %615 = vst [vmem:[#allocation2 + $0x30] sm:$0xff] %v607
        %616 = vst [vmem:[#allocation2 + $0x38] sm:$0xff] %v608
        // Predicated region
        $region53: #{tpu_custom_call.1} parent=35 // pred_check
          _
        $region54: #{tpu_custom_call.1} parent=35 // pred_check_branch
          %618 = sbr.rel (%p331) target = $region56
        $region55: #{tpu_custom_call.1} parent=35 // pred_region
          %v619 = vld [vmem:[#allocation2] sm:$0xff]
          %v620 = vld [vmem:[#allocation2 + $0x8] sm:$0xff]
          %v621 = vld [vmem:[#allocation2 + $0x10] sm:$0xff]
          %v622 = vld [vmem:[#allocation2 + $0x18] sm:$0xff]
          %v623 = vld [vmem:[#allocation2 + $0x20] sm:$0xff]
          %v624 = vld [vmem:[#allocation2 + $0x28] sm:$0xff]
          %v625 = vld [vmem:[#allocation2 + $0x30] sm:$0xff]
          %v626 = vld [vmem:[#allocation2 + $0x38] sm:$0xff]
          %v627 = vld [vmem:[%s3] sm:$0x1]
          %v629 = vperm.slane %v627, 0
          %v631 = vadd.f32 %v619, %v629
          %v632 = vadd.f32 %v620, %v629
          %v633 = vadd.f32 %v621, %v629
          %v634 = vadd.f32 %v622, %v629
          %v635 = vadd.f32 %v623, %v629
          %v636 = vadd.f32 %v624, %v629
          %v637 = vadd.f32 %v625, %v629
          %v638 = vadd.f32 %v626, %v629
          %v639 = vmax.f32 %v631, 0.0
          %v640 = vmax.f32 %v632, 0.0
          %v641 = vmax.f32 %v633, 0.0
          %v642 = vmax.f32 %v634, 0.0
          %v643 = vmax.f32 %v635, 0.0
          %v644 = vmax.f32 %v636, 0.0
          %v645 = vmax.f32 %v637, 0.0
          %v646 = vmax.f32 %v638, 0.0
          %v647 = vpack.c.bf16 %v639, %v639
          %v648 = vpack.c.bf16 %v640, %v640
          %v649 = vpack.c.bf16 %v641, %v641
          %v650 = vpack.c.bf16 %v642, %v642
          %v651 = vpack.c.bf16 %v643, %v643
          %v652 = vpack.c.bf16 %v644, %v644
          %v653 = vpack.c.bf16 %v645, %v645
          %v654 = vpack.c.bf16 %v646, %v646
          %655 = vst [vmem:[%s325] sm:$0xf] %v647
          %656 = vst [vmem:[%s325 + $0x4] sm:$0xf] %v648
          %657 = vst [vmem:[%s325 + $0x8] sm:$0xf] %v649
          %658 = vst [vmem:[%s325 + $0xc] sm:$0xf] %v650
          %659 = vst [vmem:[%s325 + $0x10] sm:$0xf] %v651
          %660 = vst [vmem:[%s325 + $0x14] sm:$0xf] %v652
          %661 = vst [vmem:[%s325 + $0x18] sm:$0xf] %v653
          %662 = vst [vmem:[%s325 + $0x1c] sm:$0xf] %v654
        $region56: #{tpu_custom_call.1} parent=35 // pred_fallthru
          _
        %s663 = sand.u32 %s154, 1
        %s664 = scalar_lea.sflag [#allocation5], %s663
        %s665 = sand.u32 %s154, 1
        %s666 = smul.addr %s665, 32
        %s667 = scalar_lea.vmem [#allocation9], %s666
        // Predicated region
        $region57: #{tpu_custom_call.1} parent=35 // pred_check
          %p668 = pneg %p164
        $region58: #{tpu_custom_call.1} parent=35 // pred_check_branch
          %670 = sbr.rel (%p668) target = $region60
        $region59: #{tpu_custom_call.1} parent=35 // pred_region
          %s671 = smul.u32 8, %s29
          %673 = vsyncadd %s664, 0
          %s674 = smul.addr %s671, 4
          %s675 = scalar_lea.hbm %s4, %s674
          %s676 = sshll.u32 %s667, 4
          %s677 = int_to_ptr.vmem [resolvable:$true] %s676
          %s678 = sshll.u32 %s675, 4
          %s679 = int_to_ptr.hbm [resolvable:$true] %s678
          %684 = dma.vmem_to_hbm [thread:$0]  %s677, 512, %s679, %s664, 64, 64, 4
        $region60: #{tpu_custom_call.1} parent=35 // pred_fallthru
          _
      $region36: #{tpu_custom_call.1} parent=5 // pred_fallthru
        _
      %p685 = scmp.le.s32.totalorder 2, %s19
      // Predicated region
      $region61: #{tpu_custom_call.1} parent=5 // pred_check
        %p686 = pneg %p685
      $region62: #{tpu_custom_call.1} parent=5 // pred_check_branch
        %688 = sbr.rel (%p686) target = $region64
      $region63: #{tpu_custom_call.1} parent=5 // pred_region
        %s689 = ssub.s32 %s19, 2
        // Predicated region
        $region65: #{tpu_custom_call.1} parent=63 // pred_check
          %p690 = pneg %p170
        $region66: #{tpu_custom_call.1} parent=63 // pred_check_branch
          %692 = sbr.rel (%p690) target = $region68
        $region67: #{tpu_custom_call.1} parent=63 // pred_region
          %s693 = sand.u32 %s155, 1
          %s694 = scalar_lea.sflag [#allocation5], %s693
          %s695 = sand.u32 %s155, 1
          %s696 = smul.addr %s695, 32
          %s697 = scalar_lea.vmem [#allocation9], %s696
          %699 = dma.done %s694, 512
        $region68: #{tpu_custom_call.1} parent=63 // pred_fallthru
          _
      $region64: #{tpu_custom_call.1} parent=5 // pred_fallthru
        _
    $region6: #{tpu_custom_call.1} parent=1 // loop_footer
      %s23 = sadd.s32 1, %s19
    $region7: #{tpu_custom_call.1} parent=1 // loop_footer_branch
      %18 = sbr.rel target = $region3
    $region8: #{tpu_custom_call.1} parent=1 // loop_exit
      _
    %700 = vsyncpa [#allocation4], 1
    %s701 = scalar_lea.sflag [#allocation4], 1
    %702 = vsyncpa %s701, 1
    %703 = vsyncpa [#allocation7], 1
    %s704 = scalar_lea.sflag [#allocation7], 1
    %705 = vsyncpa %s704, 1
    %706 = vsyncpa [#allocation5], 1
    %s707 = scalar_lea.sflag [#allocation5], 1
    %708 = vsyncpa %s707, 1

</llo_original>
